<compile_context>
chip_gen: v7x
topology: tpu7x:2x2x1
jax: 0.10.0
libtpu: 0.0.40
codegen_flags: <defaults>
</compile_context>

<pallas_src>
import math
import functools

import jax
import jax.numpy as jnp
from jax import lax
from jax.experimental import pallas as pl
from jax.experimental.pallas import tpu as pltpu


def _mha_kernel(q_ref, k_ref, v_ref,
                wq_ref, wk_ref, wv_ref,
                bq_ref, bk_ref, bv_ref,
                wo_ref, bo_ref,
                o_ref, acc_ref, *, scale):
    """One (batch row, head) grid step of multi-head attention.

    Block shapes:
      q/k/v refs : (1, S, D)   one batch row (constant along the head grid axis)
      wq/wk/wv   : (1, D, E)   per-head projection weight, pre-transposed for x @ W
      bq/bk/bv   : (1, 1, E)   per-head projection bias
      wo         : (1, E, D)   slice of Wo^T owned by this head (folds concat + out Linear)
      bo         : (1, D)      output Linear bias
      o_ref      : (1, S, D)   output row (written only on the last head)
      acc_ref    : (S, D) f32  VMEM accumulator, persistent across the head axis
    """
    h = pl.program_id(1)

    x_q = q_ref[0]                           # (S, D)
    x_k = k_ref[0]
    x_v = v_ref[0]

    # Per-head projections: x @ W^T + b (weights already transposed to (D, E)).
    q_h = jnp.dot(x_q, wq_ref[0], preferred_element_type=jnp.float32) + bq_ref[0]   # (S, E)
    k_h = jnp.dot(x_k, wk_ref[0], preferred_element_type=jnp.float32) + bk_ref[0]   # (S, E)
    v_h = jnp.dot(x_v, wv_ref[0], preferred_element_type=jnp.float32) + bv_ref[0]   # (S, E)

    # scores = (Q @ K^T) / sqrt(E); contract on E without materializing K^T.
    scores = lax.dot_general(
        q_h, k_h, (((1,), (1,)), ((), ())),
        preferred_element_type=jnp.float32) * scale                                 # (S, S)

    # Row softmax (max-subtracted); the 1/denom is folded into the epilogue scale.
    m = jnp.max(scores, axis=-1, keepdims=True)                                     # (S, 1)
    e = jnp.exp(scores - m)                                                          # (S, S)
    denom = jnp.sum(e, axis=-1, keepdims=True)                                       # (S, 1)

    attn_v = jnp.dot(e, v_h, preferred_element_type=jnp.float32)                     # (S, E)
    head_out = attn_v * pl.reciprocal(denom)                                          # (S, E)

    # Fold torch.cat + output Linear:  y = bo + sum_h head_out_h @ Wo^T[h*E:(h+1)*E, :]
    partial = jnp.dot(head_out, wo_ref[0], preferred_element_type=jnp.float32)        # (S, D)

    @pl.when(h == 0)
    def _init():
        acc_ref[...] = jnp.broadcast_to(bo_ref[...], acc_ref.shape).astype(jnp.float32)

    acc_ref[...] += partial

    @pl.when(h == pl.num_programs(1) - 1)
    def _finalize():
        o_ref[0] = acc_ref[...].astype(o_ref.dtype)


def multi_head_attention_forward(q, k, v, params, *, num_heads):
    """Pallas forward matching the PyTorch MultiHeadAttention module.

    q, k, v : (B, S, D) arrays.
    params  : dict with torch-layout weights
        'wq','wk','wv': (H, E, D) per-head Linear weights, 'bq','bk','bv': (H, E) biases,
        'wo': (D, D) output Linear weight, 'bo': (D,) bias.   (E = D // H)
    """
    B, S, D = q.shape
    H = num_heads
    E = D // H
    assert E * H == D, "d_model must be divisible by num_heads"

    # One-time wrapper-side layout prep (outside the kernel).
    wq_t = jnp.transpose(params['wq'], (0, 2, 1))            # (H, D, E)
    wk_t = jnp.transpose(params['wk'], (0, 2, 1))
    wv_t = jnp.transpose(params['wv'], (0, 2, 1))
    bq = params['bq'].reshape(H, 1, E)
    bk = params['bk'].reshape(H, 1, E)
    bv = params['bv'].reshape(H, 1, E)
    # Wo^T split by head along its input (= concat) dimension.
    wo_t = jnp.transpose(params['wo'], (1, 0)).reshape(H, E, D)   # (H, E, D)
    bo = params['bo'].reshape(1, D)

    scale = 1.0 / math.sqrt(E)
    kernel = functools.partial(_mha_kernel, scale=scale)

    row_spec = pl.BlockSpec((1, S, D), lambda b, h: (b, 0, 0))      # constant along h -> 1 DMA/row
    head_w_spec = pl.BlockSpec((1, D, E), lambda b, h: (h, 0, 0))
    head_b_spec = pl.BlockSpec((1, 1, E), lambda b, h: (h, 0, 0))
    wo_spec = pl.BlockSpec((1, E, D), lambda b, h: (h, 0, 0))
    bo_spec = pl.BlockSpec((1, D), lambda b, h: (0, 0))

    # TODO(synk): for long sequences, add a third grid axis tiling S with online-softmax
    # (running max/sum) accumulators so the (S, S) score tile never exceeds VMEM.
    return pl.pallas_call(
        kernel,
        out_shape=jax.ShapeDtypeStruct((B, S, D), q.dtype),
        grid_spec=pltpu.PrefetchScalarGridSpec(
            num_scalar_prefetch=0,
            grid=(B, H),
            in_specs=[row_spec, row_spec, row_spec,
                      head_w_spec, head_w_spec, head_w_spec,
                      head_b_spec, head_b_spec, head_b_spec,
                      wo_spec, bo_spec],
            out_specs=pl.BlockSpec((1, S, D), lambda b, h: (b, 0, 0)),
            scratch_shapes=[pltpu.VMEM((S, D), jnp.float32)],
        ),
        compiler_params=pltpu.CompilerParams(
            dimension_semantics=("parallel", "arbitrary")),
    )(q, k, v, wq_t, wk_t, wv_t, bq, bk, bv, wo_t, bo)


def multi_head_attention_reference(q, k, v, params, *, num_heads):
    """Pure-JAX reference mirroring the PyTorch module exactly."""
    H = num_heads
    D = q.shape[-1]
    E = D // H
    hp = lax.Precision.HIGHEST
    outs = []
    for h in range(H):
        Q = jnp.einsum('bsd,ed->bse', q, params['wq'][h], precision=hp) + params['bq'][h]
        K = jnp.einsum('bsd,ed->bse', k, params['wk'][h], precision=hp) + params['bk'][h]
        V = jnp.einsum('bsd,ed->bse', v, params['wv'][h], precision=hp) + params['bv'][h]
        scores = jnp.einsum('bse,bte->bst', Q, K, precision=hp) / math.sqrt(E)
        w = jax.nn.softmax(scores, axis=-1)
        outs.append(jnp.einsum('bst,bte->bse', w, V, precision=hp))
    x = jnp.concatenate(outs, axis=-1)                           # (B, S, D)
    return jnp.einsum('bsd,od->bso', x, params['wo'], precision=hp) + params['bo']


if __name__ == "__main__":
    key = jax.random.PRNGKey(0)
    B, S, D, H = 2, 8, 32, 4          # batch, seq, d_model, num_heads
    E = D // H

    keys = jax.random.split(key, 11)
    q = jax.random.normal(keys[0], (B, S, D), dtype=jnp.float32)
    k = jax.random.normal(keys[1], (B, S, D), dtype=jnp.float32)
    v = jax.random.normal(keys[2], (B, S, D), dtype=jnp.float32)

    bound = 1.0 / math.sqrt(D)
    def u(kk, shape):
        return jax.random.uniform(kk, shape, minval=-bound, maxval=bound, dtype=jnp.float32)

    params = {
        'wq': u(keys[3], (H, E, D)), 'bq': u(keys[4], (H, E)),
        'wk': u(keys[5], (H, E, D)), 'bk': u(keys[6], (H, E)),
        'wv': u(keys[7], (H, E, D)), 'bv': u(keys[8], (H, E)),
        'wo': u(keys[9], (D, D)),    'bo': u(keys[10], (D,)),
    }

    out = multi_head_attention_forward(q, k, v, params, num_heads=H)
    out = jax.block_until_ready(out)

    ref = multi_head_attention_reference(q, k, v, params, num_heads=H)
    assert out.shape == (B, S, D)
    err = jnp.max(jnp.abs(out - ref))
    assert jnp.allclose(out, ref, atol=1e-4, rtol=1e-4), f"mismatch vs reference: max abs err {err}"

    print("KERNEL_OK")
</pallas_src>

<mosaic_0001>
module attributes {stable_mosaic.version = 11 : i64} {
  func.func @_mha_kernel(%arg0: i32, %arg1: i32, %arg2: memref<1x8x32xf32, #tpu.memory_space<vmem>>, %arg3: memref<1x8x32xf32, #tpu.memory_space<vmem>>, %arg4: memref<1x8x32xf32, #tpu.memory_space<vmem>>, %arg5: memref<1x32x8xf32, #tpu.memory_space<vmem>>, %arg6: memref<1x32x8xf32, #tpu.memory_space<vmem>>, %arg7: memref<1x32x8xf32, #tpu.memory_space<vmem>>, %arg8: memref<1x1x8xf32, #tpu.memory_space<vmem>>, %arg9: memref<1x1x8xf32, #tpu.memory_space<vmem>>, %arg10: memref<1x1x8xf32, #tpu.memory_space<vmem>>, %arg11: memref<1x8x32xf32, #tpu.memory_space<vmem>>, %arg12: memref<1x32xf32, #tpu.memory_space<vmem>>, %arg13: memref<1x8x32xf32, #tpu.memory_space<vmem>>, %arg14: memref<8x32xf32, #tpu.memory_space<vmem>>) attributes {dimension_semantics = [#tpu.dimension_semantics<parallel>, #tpu.dimension_semantics<arbitrary>], iteration_bounds = array<i64: 2, 4>, scalar_prefetch = 0 : i64, scratch_operands = 1 : i64, tpu.core_type = #tpu.core_type<tc>, window_params = [{transform_indices = @transform_0, window_bounds = array<i64: 1, 8, 32>}, {transform_indices = @transform_1, window_bounds = array<i64: 1, 8, 32>}, {transform_indices = @transform_2, window_bounds = array<i64: 1, 8, 32>}, {transform_indices = @transform_3, window_bounds = array<i64: 1, 32, 8>}, {transform_indices = @transform_4, window_bounds = array<i64: 1, 32, 8>}, {transform_indices = @transform_5, window_bounds = array<i64: 1, 32, 8>}, {transform_indices = @transform_6, window_bounds = array<i64: 1, 1, 8>}, {transform_indices = @transform_7, window_bounds = array<i64: 1, 1, 8>}, {transform_indices = @transform_8, window_bounds = array<i64: 1, 1, 8>}, {transform_indices = @transform_9, window_bounds = array<i64: 1, 8, 32>}, {pipeline_mode = #tpu.pipeline_mode<synchronous>, transform_indices = @transform_10, window_bounds = array<i64: 1, 32>}, {transform_indices = @transform_11, window_bounds = array<i64: 1, 8, 32>}]} {
    %c0 = arith.constant 0 : index
    %c0_0 = arith.constant 0 : index
    %c0_1 = arith.constant 0 : index
    %0 = vector.load %arg2[%c0, %c0_0, %c0_1] : memref<1x8x32xf32, #tpu.memory_space<vmem>>, vector<1x8x32xf32>
    %1 = vector.shape_cast %0 : vector<1x8x32xf32> to vector<8x32xf32>
    %c0_2 = arith.constant 0 : index
    %c0_3 = arith.constant 0 : index
    %c0_4 = arith.constant 0 : index
    %2 = vector.load %arg3[%c0_2, %c0_3, %c0_4] : memref<1x8x32xf32, #tpu.memory_space<vmem>>, vector<1x8x32xf32>
    %3 = vector.shape_cast %2 : vector<1x8x32xf32> to vector<8x32xf32>
    %c0_5 = arith.constant 0 : index
    %c0_6 = arith.constant 0 : index
    %c0_7 = arith.constant 0 : index
    %4 = vector.load %arg4[%c0_5, %c0_6, %c0_7] : memref<1x8x32xf32, #tpu.memory_space<vmem>>, vector<1x8x32xf32>
    %5 = vector.shape_cast %4 : vector<1x8x32xf32> to vector<8x32xf32>
    %c0_8 = arith.constant 0 : index
    %c0_9 = arith.constant 0 : index
    %c0_10 = arith.constant 0 : index
    %6 = vector.load %arg5[%c0_8, %c0_9, %c0_10] : memref<1x32x8xf32, #tpu.memory_space<vmem>>, vector<1x32x8xf32>
    %7 = vector.shape_cast %6 : vector<1x32x8xf32> to vector<32x8xf32>
    %cst = arith.constant dense<0.000000e+00> : vector<8x8xf32>
    %8 = tpu.matmul %1, %7, %cst {dimension_numbers = #tpu.dot_dimension_numbers<[1], [0], [0], [1], [0, 0, 1, 1], [], []>} : vector<8x32xf32>, vector<32x8xf32>, vector<8x8xf32> -> vector<8x8xf32>
    %c0_11 = arith.constant 0 : index
    %c0_12 = arith.constant 0 : index
    %c0_13 = arith.constant 0 : index
    %9 = vector.load %arg8[%c0_11, %c0_12, %c0_13] : memref<1x1x8xf32, #tpu.memory_space<vmem>>, vector<1x1x8xf32>
    %10 = vector.shape_cast %9 : vector<1x1x8xf32> to vector<1x8xf32>
    %11 = vector.broadcast %10 : vector<1x8xf32> to vector<8x8xf32>
    %12 = arith.addf %8, %11 : vector<8x8xf32>
    %c0_14 = arith.constant 0 : index
    %c0_15 = arith.constant 0 : index
    %c0_16 = arith.constant 0 : index
    %13 = vector.load %arg6[%c0_14, %c0_15, %c0_16] : memref<1x32x8xf32, #tpu.memory_space<vmem>>, vector<1x32x8xf32>
    %14 = vector.shape_cast %13 : vector<1x32x8xf32> to vector<32x8xf32>
    %cst_17 = arith.constant dense<0.000000e+00> : vector<8x8xf32>
    %15 = tpu.matmul %3, %14, %cst_17 {dimension_numbers = #tpu.dot_dimension_numbers<[1], [0], [0], [1], [0, 0, 1, 1], [], []>} : vector<8x32xf32>, vector<32x8xf32>, vector<8x8xf32> -> vector<8x8xf32>
    %c0_18 = arith.constant 0 : index
    %c0_19 = arith.constant 0 : index
    %c0_20 = arith.constant 0 : index
    %16 = vector.load %arg9[%c0_18, %c0_19, %c0_20] : memref<1x1x8xf32, #tpu.memory_space<vmem>>, vector<1x1x8xf32>
    %17 = vector.shape_cast %16 : vector<1x1x8xf32> to vector<1x8xf32>
    %18 = vector.broadcast %17 : vector<1x8xf32> to vector<8x8xf32>
    %19 = arith.addf %15, %18 : vector<8x8xf32>
    %c0_21 = arith.constant 0 : index
    %c0_22 = arith.constant 0 : index
    %c0_23 = arith.constant 0 : index
    %20 = vector.load %arg7[%c0_21, %c0_22, %c0_23] : memref<1x32x8xf32, #tpu.memory_space<vmem>>, vector<1x32x8xf32>
    %21 = vector.shape_cast %20 : vector<1x32x8xf32> to vector<32x8xf32>
    %cst_24 = arith.constant dense<0.000000e+00> : vector<8x8xf32>
    %22 = tpu.matmul %5, %21, %cst_24 {dimension_numbers = #tpu.dot_dimension_numbers<[1], [0], [0], [1], [0, 0, 1, 1], [], []>} : vector<8x32xf32>, vector<32x8xf32>, vector<8x8xf32> -> vector<8x8xf32>
    %c0_25 = arith.constant 0 : index
    %c0_26 = arith.constant 0 : index
    %c0_27 = arith.constant 0 : index
    %23 = vector.load %arg10[%c0_25, %c0_26, %c0_27] : memref<1x1x8xf32, #tpu.memory_space<vmem>>, vector<1x1x8xf32>
    %24 = vector.shape_cast %23 : vector<1x1x8xf32> to vector<1x8xf32>
    %25 = vector.broadcast %24 : vector<1x8xf32> to vector<8x8xf32>
    %26 = arith.addf %22, %25 : vector<8x8xf32>
    %cst_28 = arith.constant dense<0.000000e+00> : vector<8x8xf32>
    %27 = tpu.matmul %12, %19, %cst_28 {dimension_numbers = #tpu.dot_dimension_numbers<[1], [1], [0], [0], [0, 0, 1, 0], [], []>} : vector<8x8xf32>, vector<8x8xf32>, vector<8x8xf32> -> vector<8x8xf32>
    %cst_29 = arith.constant 0.353553385 : f32
    %28 = vector.broadcast %cst_29 : f32 to vector<8x8xf32>
    %29 = arith.mulf %27, %28 : vector<8x8xf32>
    %cst_30 = arith.constant dense<0xFF800000> : vector<8xf32>
    %30 = vector.multi_reduction <maximumf>, %29, %cst_30 [1] : vector<8x8xf32> to vector<8xf32>
    %31 = vector.shape_cast %30 : vector<8xf32> to vector<8x1xf32>
    %32 = vector.broadcast %31 : vector<8x1xf32> to vector<8x8xf32>
    %33 = arith.subf %29, %32 : vector<8x8xf32>
    %34 = math.exp %33 : vector<8x8xf32>
    %cst_31 = arith.constant dense<0.000000e+00> : vector<8xf32>
    %35 = vector.multi_reduction <add>, %34, %cst_31 [1] : vector<8x8xf32> to vector<8xf32>
    %36 = vector.shape_cast %35 : vector<8xf32> to vector<8x1xf32>
    %cst_32 = arith.constant dense<0.000000e+00> : vector<8x8xf32>
    %37 = tpu.matmul %34, %26, %cst_32 {dimension_numbers = #tpu.dot_dimension_numbers<[1], [0], [0], [1], [0, 0, 1, 1], [], []>} : vector<8x8xf32>, vector<8x8xf32>, vector<8x8xf32> -> vector<8x8xf32>
    %38 = tpu.reciprocal %36 : vector<8x1xf32> -> vector<8x1xf32>
    %39 = vector.broadcast %38 : vector<8x1xf32> to vector<8x8xf32>
    %40 = arith.mulf %37, %39 : vector<8x8xf32>
    %c0_33 = arith.constant 0 : index
    %c0_34 = arith.constant 0 : index
    %c0_35 = arith.constant 0 : index
    %41 = vector.load %arg11[%c0_33, %c0_34, %c0_35] : memref<1x8x32xf32, #tpu.memory_space<vmem>>, vector<1x8x32xf32>
    %42 = vector.shape_cast %41 : vector<1x8x32xf32> to vector<8x32xf32>
    %cst_36 = arith.constant dense<0.000000e+00> : vector<8x32xf32>
    %43 = tpu.matmul %40, %42, %cst_36 {dimension_numbers = #tpu.dot_dimension_numbers<[1], [0], [0], [1], [0, 0, 1, 1], [], []>} : vector<8x8xf32>, vector<8x32xf32>, vector<8x32xf32> -> vector<8x32xf32>
    %c0_i32 = arith.constant 0 : i32
    %44 = arith.cmpi eq, %arg1, %c0_i32 : i32
    %45 = arith.extui %44 : i1 to i32
    %c0_i32_37 = arith.constant 0 : i32
    %46 = arith.cmpi ne, %45, %c0_i32_37 : i32
    scf.if %46 {
      %c0_43 = arith.constant 0 : index
      %c0_44 = arith.constant 0 : index
      %53 = vector.load %arg12[%c0_43, %c0_44] : memref<1x32xf32, #tpu.memory_space<vmem>>, vector<1x32xf32>
      %54 = vector.shape_cast %53 : vector<1x32xf32> to vector<1x32xf32>
      %55 = vector.broadcast %54 : vector<1x32xf32> to vector<8x32xf32>
      %c0_45 = arith.constant 0 : index
      %c0_46 = arith.constant 0 : index
      %56 = vector.load %arg14[%c0_45, %c0_46] : memref<8x32xf32, #tpu.memory_space<vmem>>, vector<8x32xf32>
      tpu.vector_store %arg14[%c0_45, %c0_46], %55 {strides = array<i32>} : memref<8x32xf32, #tpu.memory_space<vmem>>, vector<8x32xf32>,
    } else {
    }
    %c0_38 = arith.constant 0 : index
    %c0_39 = arith.constant 0 : index
    %47 = vector.load %arg14[%c0_38, %c0_39] : memref<8x32xf32, #tpu.memory_space<vmem>>, vector<8x32xf32>
    %48 = arith.addf %47, %43 : vector<8x32xf32>
    %c0_40 = arith.constant 0 : index
    %c0_41 = arith.constant 0 : index
    %49 = vector.load %arg14[%c0_40, %c0_41] : memref<8x32xf32, #tpu.memory_space<vmem>>, vector<8x32xf32>
    tpu.vector_store %arg14[%c0_40, %c0_41], %48 {strides = array<i32>} : memref<8x32xf32, #tpu.memory_space<vmem>>, vector<8x32xf32>,
    %c3_i32 = arith.constant 3 : i32
    %50 = arith.cmpi eq, %arg1, %c3_i32 : i32
    %51 = arith.extui %50 : i1 to i32
    %c0_i32_42 = arith.constant 0 : i32
    %52 = arith.cmpi ne, %51, %c0_i32_42 : i32
    scf.if %52 {
      %c0_43 = arith.constant 0 : index
      %c0_44 = arith.constant 0 : index
      %53 = vector.load %arg14[%c0_43, %c0_44] : memref<8x32xf32, #tpu.memory_space<vmem>>, vector<8x32xf32>
      %c0_45 = arith.constant 0 : index
      %c0_46 = arith.constant 0 : index
      %c0_47 = arith.constant 0 : index
      %54 = vector.load %arg13[%c0_45, %c0_46, %c0_47] : memref<1x8x32xf32, #tpu.memory_space<vmem>>, vector<1x8x32xf32>
      %55 = vector.shape_cast %54 : vector<1x8x32xf32> to vector<8x32xf32>
      %56 = vector.shape_cast %53 : vector<8x32xf32> to vector<1x8x32xf32>
      tpu.vector_store %arg13[%c0_45, %c0_46, %c0_47], %56 {strides = array<i32>} : memref<1x8x32xf32, #tpu.memory_space<vmem>>, vector<1x8x32xf32>,
    } else {
    }
    return
  }
  func.func @transform_0(%arg0: i32, %arg1: i32) -> (i32, i32, i32) {
    %c0_i32 = arith.constant 0 : i32
    %c0_i32_0 = arith.constant 0 : i32
    %c0_i32_1 = arith.constant 0 : i32
    return %arg0, %c0_i32, %c0_i32_0 : i32, i32, i32
  }
  func.func @transform_1(%arg0: i32, %arg1: i32) -> (i32, i32, i32) {
    %c0_i32 = arith.constant 0 : i32
    %c0_i32_0 = arith.constant 0 : i32
    %c0_i32_1 = arith.constant 0 : i32
    return %arg0, %c0_i32, %c0_i32_0 : i32, i32, i32
  }
  func.func @transform_2(%arg0: i32, %arg1: i32) -> (i32, i32, i32) {
    %c0_i32 = arith.constant 0 : i32
    %c0_i32_0 = arith.constant 0 : i32
    %c0_i32_1 = arith.constant 0 : i32
    return %arg0, %c0_i32, %c0_i32_0 : i32, i32, i32
  }
  func.func @transform_3(%arg0: i32, %arg1: i32) -> (i32, i32, i32) {
    %c0_i32 = arith.constant 0 : i32
    %c0_i32_0 = arith.constant 0 : i32
    %c0_i32_1 = arith.constant 0 : i32
    return %arg1, %c0_i32, %c0_i32_0 : i32, i32, i32
  }
  func.func @transform_4(%arg0: i32, %arg1: i32) -> (i32, i32, i32) {
    %c0_i32 = arith.constant 0 : i32
    %c0_i32_0 = arith.constant 0 : i32
    %c0_i32_1 = arith.constant 0 : i32
    return %arg1, %c0_i32, %c0_i32_0 : i32, i32, i32
  }
  func.func @transform_5(%arg0: i32, %arg1: i32) -> (i32, i32, i32) {
    %c0_i32 = arith.constant 0 : i32
    %c0_i32_0 = arith.constant 0 : i32
    %c0_i32_1 = arith.constant 0 : i32
    return %arg1, %c0_i32, %c0_i32_0 : i32, i32, i32
  }
  func.func @transform_6(%arg0: i32, %arg1: i32) -> (i32, i32, i32) {
    %c0_i32 = arith.constant 0 : i32
    %c0_i32_0 = arith.constant 0 : i32
    %c0_i32_1 = arith.constant 0 : i32
    return %arg1, %c0_i32, %c0_i32_0 : i32, i32, i32
  }
  func.func @transform_7(%arg0: i32, %arg1: i32) -> (i32, i32, i32) {
    %c0_i32 = arith.constant 0 : i32
    %c0_i32_0 = arith.constant 0 : i32
    %c0_i32_1 = arith.constant 0 : i32
    return %arg1, %c0_i32, %c0_i32_0 : i32, i32, i32
  }
  func.func @transform_8(%arg0: i32, %arg1: i32) -> (i32, i32, i32) {
    %c0_i32 = arith.constant 0 : i32
    %c0_i32_0 = arith.constant 0 : i32
    %c0_i32_1 = arith.constant 0 : i32
    return %arg1, %c0_i32, %c0_i32_0 : i32, i32, i32
  }
  func.func @transform_9(%arg0: i32, %arg1: i32) -> (i32, i32, i32) {
    %c0_i32 = arith.constant 0 : i32
    %c0_i32_0 = arith.constant 0 : i32
    %c0_i32_1 = arith.constant 0 : i32
    return %arg1, %c0_i32, %c0_i32_0 : i32, i32, i32
  }
  func.func @transform_10(%arg0: i32, %arg1: i32) -> (i32, i32) {
    %c0_i32 = arith.constant 0 : i32
    %c0_i32_0 = arith.constant 0 : i32
    %c0_i32_1 = arith.constant 0 : i32
    return %c0_i32, %c0_i32_0 : i32, i32
  }
  func.func @transform_11(%arg0: i32, %arg1: i32) -> (i32, i32, i32) {
    %c0_i32 = arith.constant 0 : i32
    %c0_i32_0 = arith.constant 0 : i32
    %c0_i32_1 = arith.constant 0 : i32
    return %arg0, %c0_i32, %c0_i32_0 : i32, i32, i32
  }
}

</mosaic_0001>

<llo_original>
// kernel: tpu_custom_call.1
$region0: #{tpu_custom_call.1}
  #allocation0 [shape = 'u32[]', space=smem, size = 0x4, offset = 0x4, fixed_abs, tag = 'smem constant byte address 0x4 - core index']
  #allocation1 [shape = 'u32[144,128]{1,0:T(1,128)}', space=vmem, size = 0x12000, scoped, tag = 'internal scratch']
  #allocation2 [shape = 'f32[8,32]{1,0:T(8,128)}', space=vmem, size = 0x1000, scoped, tag = 'scratch operand']
  %s0 = inlined_call_operand.vmem [shape: f32[2,8,32], index: 0, kind: input, shape index: {}]
  %s1 = inlined_call_operand.vmem [shape: f32[2,8,32], index: 1, kind: input, shape index: {}]
  %s2 = inlined_call_operand.vmem [shape: f32[2,8,32], index: 2, kind: input, shape index: {}]
  %s3 = inlined_call_operand.vmem [shape: f32[4,32,8], index: 3, kind: input, shape index: {}]
  %s4 = inlined_call_operand.vmem [shape: f32[4,32,8], index: 4, kind: input, shape index: {}]
  %s5 = inlined_call_operand.vmem [shape: f32[4,32,8], index: 5, kind: input, shape index: {}]
  %s6 = inlined_call_operand.vmem [shape: f32[4,1,8], index: 6, kind: input, shape index: {}]
  %s7 = inlined_call_operand.vmem [shape: f32[4,1,8], index: 7, kind: input, shape index: {}]
  %s8 = inlined_call_operand.vmem [shape: f32[4,1,8], index: 8, kind: input, shape index: {}]
  %s9 = inlined_call_operand.vmem [shape: f32[4,8,32], index: 9, kind: input, shape index: {}]
  %s10 = inlined_call_operand.vmem [shape: f32[1,32], index: 10, kind: input, shape index: {}]
  %s11 = inlined_call_operand.hbm [shape: f32[2,8,32], index: 11, kind: output, shape index: {}]
  %s12 = sld [smem:[#allocation0]]
  $region85: #{tpu_custom_call.1} parent=0
    _
  %s14 = ssub.s32 1, %s12
  %s15 = scalar_select 0, %s14, %s12
  $region1: #{tpu_custom_call.1} parent=0
    #allocation3 [shape = 'u8[8192]{0}', space=vmem, size = 0x2000, scoped, tag = 'output window, operand 0']
    #allocation4 [shape = 's32[2]{0}', space=sflag, size = 0x8, scoped, tag = 'scoped memory for tpu_custom_call.1']
    %16 = vsyncpa [#allocation4], 0
    %s17 = scalar_lea.sflag [#allocation4], 1
    %18 = vsyncpa %s17, 0
    loop: start=0, step=1, limit=10
    $region2: #{tpu_custom_call.1} parent=1 // loop_pre_header
      _
    $region3: #{tpu_custom_call.1} parent=1 // loop_header
      %s20 = sphi 0, %s24
      %p21 = scmp.ge.s32.totalorder %s20, 10
      %s27 = sphi 0, %s39
      %s28 = sphi 0, %s35
      %s29 = sphi 0, %s27
      %s30 = sphi 0, %s28
      %s31 = sphi 0, %s29
      %s32 = sphi 0, %s30
      %s42 = sphi 0, %s44
      %s45 = sphi 0, %s42
      %s46 = sphi 0, %s45
      %s62 = sphi 0, %s46
      %s68 = sphi 0, %s70
      %s71 = sphi 0, %s68
      %s72 = sphi 0, %s71
      %s88 = sphi 0, %s72
      %s94 = sphi 0, %s96
      %s97 = sphi 0, %s94
      %s98 = sphi 0, %s97
      %s114 = sphi 0, %s98
      %s120 = sphi 0, %s122
      %s123 = sphi 0, %s120
      %s124 = sphi 0, %s123
      %s140 = sphi 0, %s124
      %s146 = sphi 0, %s148
      %s149 = sphi 0, %s146
      %s150 = sphi 0, %s149
      %s166 = sphi 0, %s150
      %s172 = sphi 0, %s174
      %s175 = sphi 0, %s172
      %s176 = sphi 0, %s175
      %s192 = sphi 0, %s176
      %s198 = sphi 0, %s200
      %s201 = sphi 0, %s198
      %s202 = sphi 0, %s201
      %s218 = sphi 0, %s202
      %s224 = sphi 0, %s226
      %s227 = sphi 0, %s224
      %s228 = sphi 0, %s227
      %s244 = sphi 0, %s228
      %s250 = sphi 0, %s252
      %s253 = sphi 0, %s250
      %s254 = sphi 0, %s253
      %s270 = sphi 0, %s254
      %s276 = sphi 0, %s278
      %s279 = sphi 0, %s276
      %s280 = sphi 0, %s279
      %s296 = sphi 0, %s280
      %s300 = sphi 0, %s300
      %s302 = sphi 0, %s300
      %s303 = sphi 0, %s302
      %s317 = sphi 0, %s303
      %s323 = sphi 0, %s325
      %s326 = sphi 0, %s323
      %s327 = sphi 0, %s326
      %s343 = sphi 0, %s327
    $region4: #{tpu_custom_call.1} parent=1 // loop_header_branch
      %23 = sbr.rel (%p21) target = $region8
    $region5: #{tpu_custom_call.1} parent=1 // loop_body
      %s25 = ssub.s32 %s20, 1
      %s26 = ssub.s32 %s20, 2
      %s33 = sadd.s32 1, %s28
      %p34 = scmp.ge.s32.totalorder %s33, 4
      %s35 = scalar_select %p34, 0, %s33
      %s36 = sadd.s32 1, %s27
      %s37 = scalar_select %p34, %s36, %s27
      %p38 = scmp.ge.s32.totalorder %s37, 2
      %s39 = scalar_select %p38, 0, %s37
      %s40 = ssub.s32 %s27, %s39
      %p41 = scmp.eq.s32.totalorder %s40, 0
      %s43 = sadd.s32 %s42, 1
      %s44 = scalar_select %p41, %s42, %s43
      %p47 = pneg %p41
      %p48 = scmp.eq.s32.totalorder %s20, 7
      %p49 = por %p47, %p48
      %p50 = scmp.ne.s32.totalorder %s42, %s45
      %p51 = scmp.eq.s32.totalorder %s20, 0
      %p52 = por %p50, %p51
      %p53 = scmp.ne.s32.totalorder %s42, %s45
      %p54 = scmp.eq.s32.totalorder %s25, 7
      %p55 = por %p53, %p54
      %p56 = scmp.ne.s32.totalorder %s45, %s46
      %p57 = scmp.eq.s32.totalorder %s25, 0
      %p58 = por %p56, %p57
      %p59 = scmp.ne.s32.totalorder %s45, %s46
      %p60 = scmp.eq.s32.totalorder %s26, 7
      %p61 = por %p59, %p60
      %p63 = scmp.ne.s32.totalorder %s46, %s62
      %p64 = scmp.eq.s32.totalorder %s26, 0
      %p65 = por %p63, %p64
      %s66 = ssub.s32 %s27, %s39
      %p67 = scmp.eq.s32.totalorder %s66, 0
      %s69 = sadd.s32 %s68, 1
      %s70 = scalar_select %p67, %s68, %s69
      %p73 = pneg %p67
      %p74 = scmp.eq.s32.totalorder %s20, 7
      %p75 = por %p73, %p74
      %p76 = scmp.ne.s32.totalorder %s68, %s71
      %p77 = scmp.eq.s32.totalorder %s20, 0
      %p78 = por %p76, %p77
      %p79 = scmp.ne.s32.totalorder %s68, %s71
      %p80 = scmp.eq.s32.totalorder %s25, 7
      %p81 = por %p79, %p80
      %p82 = scmp.ne.s32.totalorder %s71, %s72
      %p83 = scmp.eq.s32.totalorder %s25, 0
      %p84 = por %p82, %p83
      %p85 = scmp.ne.s32.totalorder %s71, %s72
      %p86 = scmp.eq.s32.totalorder %s26, 7
      %p87 = por %p85, %p86
      %p89 = scmp.ne.s32.totalorder %s72, %s88
      %p90 = scmp.eq.s32.totalorder %s26, 0
      %p91 = por %p89, %p90
      %s92 = ssub.s32 %s27, %s39
      %p93 = scmp.eq.s32.totalorder %s92, 0
      %s95 = sadd.s32 %s94, 1
      %s96 = scalar_select %p93, %s94, %s95
      %p99 = pneg %p93
      %p100 = scmp.eq.s32.totalorder %s20, 7
      %p101 = por %p99, %p100
      %p102 = scmp.ne.s32.totalorder %s94, %s97
      %p103 = scmp.eq.s32.totalorder %s20, 0
      %p104 = por %p102, %p103
      %p105 = scmp.ne.s32.totalorder %s94, %s97
      %p106 = scmp.eq.s32.totalorder %s25, 7
      %p107 = por %p105, %p106
      %p108 = scmp.ne.s32.totalorder %s97, %s98
      %p109 = scmp.eq.s32.totalorder %s25, 0
      %p110 = por %p108, %p109
      %p111 = scmp.ne.s32.totalorder %s97, %s98
      %p112 = scmp.eq.s32.totalorder %s26, 7
      %p113 = por %p111, %p112
      %p115 = scmp.ne.s32.totalorder %s98, %s114
      %p116 = scmp.eq.s32.totalorder %s26, 0
      %p117 = por %p115, %p116
      %s118 = ssub.s32 %s28, %s35
      %p119 = scmp.eq.s32.totalorder %s118, 0
      %s121 = sadd.s32 %s120, 1
      %s122 = scalar_select %p119, %s120, %s121
      %p125 = pneg %p119
      %p126 = scmp.eq.s32.totalorder %s20, 7
      %p127 = por %p125, %p126
      %p128 = scmp.ne.s32.totalorder %s120, %s123
      %p129 = scmp.eq.s32.totalorder %s20, 0
      %p130 = por %p128, %p129
      %p131 = scmp.ne.s32.totalorder %s120, %s123
      %p132 = scmp.eq.s32.totalorder %s25, 7
      %p133 = por %p131, %p132
      %p134 = scmp.ne.s32.totalorder %s123, %s124
      %p135 = scmp.eq.s32.totalorder %s25, 0
      %p136 = por %p134, %p135
      %p137 = scmp.ne.s32.totalorder %s123, %s124
      %p138 = scmp.eq.s32.totalorder %s26, 7
      %p139 = por %p137, %p138
      %p141 = scmp.ne.s32.totalorder %s124, %s140
      %p142 = scmp.eq.s32.totalorder %s26, 0
      %p143 = por %p141, %p142
      %s144 = ssub.s32 %s28, %s35
      %p145 = scmp.eq.s32.totalorder %s144, 0
      %s147 = sadd.s32 %s146, 1
      %s148 = scalar_select %p145, %s146, %s147
      %p151 = pneg %p145
      %p152 = scmp.eq.s32.totalorder %s20, 7
      %p153 = por %p151, %p152
      %p154 = scmp.ne.s32.totalorder %s146, %s149
      %p155 = scmp.eq.s32.totalorder %s20, 0
      %p156 = por %p154, %p155
      %p157 = scmp.ne.s32.totalorder %s146, %s149
      %p158 = scmp.eq.s32.totalorder %s25, 7
      %p159 = por %p157, %p158
      %p160 = scmp.ne.s32.totalorder %s149, %s150
      %p161 = scmp.eq.s32.totalorder %s25, 0
      %p162 = por %p160, %p161
      %p163 = scmp.ne.s32.totalorder %s149, %s150
      %p164 = scmp.eq.s32.totalorder %s26, 7
      %p165 = por %p163, %p164
      %p167 = scmp.ne.s32.totalorder %s150, %s166
      %p168 = scmp.eq.s32.totalorder %s26, 0
      %p169 = por %p167, %p168
      %s170 = ssub.s32 %s28, %s35
      %p171 = scmp.eq.s32.totalorder %s170, 0
      %s173 = sadd.s32 %s172, 1
      %s174 = scalar_select %p171, %s172, %s173
      %p177 = pneg %p171
      %p178 = scmp.eq.s32.totalorder %s20, 7
      %p179 = por %p177, %p178
      %p180 = scmp.ne.s32.totalorder %s172, %s175
      %p181 = scmp.eq.s32.totalorder %s20, 0
      %p182 = por %p180, %p181
      %p183 = scmp.ne.s32.totalorder %s172, %s175
      %p184 = scmp.eq.s32.totalorder %s25, 7
      %p185 = por %p183, %p184
      %p186 = scmp.ne.s32.totalorder %s175, %s176
      %p187 = scmp.eq.s32.totalorder %s25, 0
      %p188 = por %p186, %p187
      %p189 = scmp.ne.s32.totalorder %s175, %s176
      %p190 = scmp.eq.s32.totalorder %s26, 7
      %p191 = por %p189, %p190
      %p193 = scmp.ne.s32.totalorder %s176, %s192
      %p194 = scmp.eq.s32.totalorder %s26, 0
      %p195 = por %p193, %p194
      %s196 = ssub.s32 %s28, %s35
      %p197 = scmp.eq.s32.totalorder %s196, 0
      %s199 = sadd.s32 %s198, 1
      %s200 = scalar_select %p197, %s198, %s199
      %p203 = pneg %p197
      %p204 = scmp.eq.s32.totalorder %s20, 7
      %p205 = por %p203, %p204
      %p206 = scmp.ne.s32.totalorder %s198, %s201
      %p207 = scmp.eq.s32.totalorder %s20, 0
      %p208 = por %p206, %p207
      %p209 = scmp.ne.s32.totalorder %s198, %s201
      %p210 = scmp.eq.s32.totalorder %s25, 7
      %p211 = por %p209, %p210
      %p212 = scmp.ne.s32.totalorder %s201, %s202
      %p213 = scmp.eq.s32.totalorder %s25, 0
      %p214 = por %p212, %p213
      %p215 = scmp.ne.s32.totalorder %s201, %s202
      %p216 = scmp.eq.s32.totalorder %s26, 7
      %p217 = por %p215, %p216
      %p219 = scmp.ne.s32.totalorder %s202, %s218
      %p220 = scmp.eq.s32.totalorder %s26, 0
      %p221 = por %p219, %p220
      %s222 = ssub.s32 %s28, %s35
      %p223 = scmp.eq.s32.totalorder %s222, 0
      %s225 = sadd.s32 %s224, 1
      %s226 = scalar_select %p223, %s224, %s225
      %p229 = pneg %p223
      %p230 = scmp.eq.s32.totalorder %s20, 7
      %p231 = por %p229, %p230
      %p232 = scmp.ne.s32.totalorder %s224, %s227
      %p233 = scmp.eq.s32.totalorder %s20, 0
      %p234 = por %p232, %p233
      %p235 = scmp.ne.s32.totalorder %s224, %s227
      %p236 = scmp.eq.s32.totalorder %s25, 7
      %p237 = por %p235, %p236
      %p238 = scmp.ne.s32.totalorder %s227, %s228
      %p239 = scmp.eq.s32.totalorder %s25, 0
      %p240 = por %p238, %p239
      %p241 = scmp.ne.s32.totalorder %s227, %s228
      %p242 = scmp.eq.s32.totalorder %s26, 7
      %p243 = por %p241, %p242
      %p245 = scmp.ne.s32.totalorder %s228, %s244
      %p246 = scmp.eq.s32.totalorder %s26, 0
      %p247 = por %p245, %p246
      %s248 = ssub.s32 %s28, %s35
      %p249 = scmp.eq.s32.totalorder %s248, 0
      %s251 = sadd.s32 %s250, 1
      %s252 = scalar_select %p249, %s250, %s251
      %p255 = pneg %p249
      %p256 = scmp.eq.s32.totalorder %s20, 7
      %p257 = por %p255, %p256
      %p258 = scmp.ne.s32.totalorder %s250, %s253
      %p259 = scmp.eq.s32.totalorder %s20, 0
      %p260 = por %p258, %p259
      %p261 = scmp.ne.s32.totalorder %s250, %s253
      %p262 = scmp.eq.s32.totalorder %s25, 7
      %p263 = por %p261, %p262
      %p264 = scmp.ne.s32.totalorder %s253, %s254
      %p265 = scmp.eq.s32.totalorder %s25, 0
      %p266 = por %p264, %p265
      %p267 = scmp.ne.s32.totalorder %s253, %s254
      %p268 = scmp.eq.s32.totalorder %s26, 7
      %p269 = por %p267, %p268
      %p271 = scmp.ne.s32.totalorder %s254, %s270
      %p272 = scmp.eq.s32.totalorder %s26, 0
      %p273 = por %p271, %p272
      %s274 = ssub.s32 %s28, %s35
      %p275 = scmp.eq.s32.totalorder %s274, 0
      %s277 = sadd.s32 %s276, 1
      %s278 = scalar_select %p275, %s276, %s277
      %p281 = pneg %p275
      %p282 = scmp.eq.s32.totalorder %s20, 7
      %p283 = por %p281, %p282
      %p284 = scmp.ne.s32.totalorder %s276, %s279
      %p285 = scmp.eq.s32.totalorder %s20, 0
      %p286 = por %p284, %p285
      %p287 = scmp.ne.s32.totalorder %s276, %s279
      %p288 = scmp.eq.s32.totalorder %s25, 7
      %p289 = por %p287, %p288
      %p290 = scmp.ne.s32.totalorder %s279, %s280
      %p291 = scmp.eq.s32.totalorder %s25, 0
      %p292 = por %p290, %p291
      %p293 = scmp.ne.s32.totalorder %s279, %s280
      %p294 = scmp.eq.s32.totalorder %s26, 7
      %p295 = por %p293, %p294
      %p297 = scmp.ne.s32.totalorder %s280, %s296
      %p298 = scmp.eq.s32.totalorder %s26, 0
      %p299 = por %p297, %p298
      %s301 = sadd.s32 %s300, 1
      %p304 = scmp.eq.s32.totalorder %s20, 7
      %p305 = scmp.ne.s32.totalorder %s300, %s302
      %p306 = scmp.eq.s32.totalorder %s20, 0
      %p307 = por %p305, %p306
      %p308 = scmp.ne.s32.totalorder %s300, %s302
      %p309 = scmp.eq.s32.totalorder %s25, 7
      %p310 = por %p308, %p309
      %p311 = scmp.ne.s32.totalorder %s302, %s303
      %p312 = scmp.eq.s32.totalorder %s25, 0
      %p313 = por %p311, %p312
      %p314 = scmp.ne.s32.totalorder %s302, %s303
      %p315 = scmp.eq.s32.totalorder %s26, 7
      %p316 = por %p314, %p315
      %p318 = scmp.ne.s32.totalorder %s303, %s317
      %p319 = scmp.eq.s32.totalorder %s26, 0
      %p320 = por %p318, %p319
      %s321 = ssub.s32 %s27, %s39
      %p322 = scmp.eq.s32.totalorder %s321, 0
      %s324 = sadd.s32 %s323, 1
      %s325 = scalar_select %p322, %s323, %s324
      %p328 = pneg %p322
      %p329 = scmp.eq.s32.totalorder %s20, 7
      %p330 = por %p328, %p329
      %p331 = scmp.ne.s32.totalorder %s323, %s326
      %p332 = scmp.eq.s32.totalorder %s20, 0
      %p333 = por %p331, %p332
      %p334 = scmp.ne.s32.totalorder %s323, %s326
      %p335 = scmp.eq.s32.totalorder %s25, 7
      %p336 = por %p334, %p335
      %p337 = scmp.ne.s32.totalorder %s326, %s327
      %p338 = scmp.eq.s32.totalorder %s25, 0
      %p339 = por %p337, %p338
      %p340 = scmp.ne.s32.totalorder %s326, %s327
      %p341 = scmp.eq.s32.totalorder %s26, 7
      %p342 = por %p340, %p341
      %p344 = scmp.ne.s32.totalorder %s327, %s343
      %p345 = scmp.eq.s32.totalorder %s26, 0
      %p346 = por %p344, %p345
      %p347 = scmp.le.s32.totalorder 1, %s20
      %p348 = scmp.lt.s32.totalorder %s20, 9
      %p349 = pnand %p347, %p348
      %p350 = pneg %p349
      // Predicated region
      $region9: #{tpu_custom_call.1} parent=5 // pred_check
        _
      $region10: #{tpu_custom_call.1} parent=5 // pred_check_branch
        %352 = sbr.rel (%p349) target = $region12
      $region11: #{tpu_custom_call.1} parent=5 // pred_region
        %s353 = ssub.s32 %s20, 1
        // Predicated region
        $region13: #{tpu_custom_call.1} parent=11 // pred_check
          %p354 = pneg %p313
        $region14: #{tpu_custom_call.1} parent=11 // pred_check_branch
          %356 = sbr.rel (%p354) target = $region16
        $region15: #{tpu_custom_call.1} parent=11 // pred_region
          _
        $region16: #{tpu_custom_call.1} parent=11 // pred_fallthru
          _
      $region12: #{tpu_custom_call.1} parent=5 // pred_fallthru
        _
      %p357 = scmp.lt.s32.totalorder %s20, 8
      // Predicated region
      $region17: #{tpu_custom_call.1} parent=5 // pred_check
        %p358 = pneg %p357
      $region18: #{tpu_custom_call.1} parent=5 // pred_check_branch
        %360 = sbr.rel (%p358) target = $region20
      $region19: #{tpu_custom_call.1} parent=5 // pred_region
        // Predicated region
        $region21: #{tpu_custom_call.1} parent=19 // pred_check
          %p361 = pneg %p52
        $region22: #{tpu_custom_call.1} parent=19 // pred_check_branch
          %363 = sbr.rel (%p361) target = $region24
        $region23: #{tpu_custom_call.1} parent=19 // pred_region
          %p364 = scmp.lt.s32.totalorder %s27, 1
          %s365 = scalar_select %p364, %s27, 1
          %s366 = smul.addr %s365, 8
          %s367 = scalar_lea.vmem %s0, %s366
        $region24: #{tpu_custom_call.1} parent=19 // pred_fallthru
          _
        // Predicated region
        $region25: #{tpu_custom_call.1} parent=19 // pred_check
          %p368 = pneg %p78
        $region26: #{tpu_custom_call.1} parent=19 // pred_check_branch
          %370 = sbr.rel (%p368) target = $region28
        $region27: #{tpu_custom_call.1} parent=19 // pred_region
          %p371 = scmp.lt.s32.totalorder %s27, 1
          %s372 = scalar_select %p371, %s27, 1
          %s373 = smul.addr %s372, 8
          %s374 = scalar_lea.vmem %s1, %s373
        $region28: #{tpu_custom_call.1} parent=19 // pred_fallthru
          _
        // Predicated region
        $region29: #{tpu_custom_call.1} parent=19 // pred_check
          %p375 = pneg %p104
        $region30: #{tpu_custom_call.1} parent=19 // pred_check_branch
          %377 = sbr.rel (%p375) target = $region32
        $region31: #{tpu_custom_call.1} parent=19 // pred_region
          %p378 = scmp.lt.s32.totalorder %s27, 1
          %s379 = scalar_select %p378, %s27, 1
          %s380 = smul.addr %s379, 8
          %s381 = scalar_lea.vmem %s2, %s380
        $region32: #{tpu_custom_call.1} parent=19 // pred_fallthru
          _
        // Predicated region
        $region33: #{tpu_custom_call.1} parent=19 // pred_check
          %p382 = pneg %p130
        $region34: #{tpu_custom_call.1} parent=19 // pred_check_branch
          %384 = sbr.rel (%p382) target = $region36
        $region35: #{tpu_custom_call.1} parent=19 // pred_region
          %p385 = scmp.lt.s32.totalorder %s28, 3
          %s386 = scalar_select %p385, %s28, 3
          %s387 = smul.addr %s386, 4
          %s388 = smul.addr %s387, 8
          %s389 = scalar_lea.vmem %s3, %s388
        $region36: #{tpu_custom_call.1} parent=19 // pred_fallthru
          _
        // Predicated region
        $region37: #{tpu_custom_call.1} parent=19 // pred_check
          %p390 = pneg %p156
        $region38: #{tpu_custom_call.1} parent=19 // pred_check_branch
          %392 = sbr.rel (%p390) target = $region40
        $region39: #{tpu_custom_call.1} parent=19 // pred_region
          %p393 = scmp.lt.s32.totalorder %s28, 3
          %s394 = scalar_select %p393, %s28, 3
          %s395 = smul.addr %s394, 4
          %s396 = smul.addr %s395, 8
          %s397 = scalar_lea.vmem %s4, %s396
        $region40: #{tpu_custom_call.1} parent=19 // pred_fallthru
          _
        // Predicated region
        $region41: #{tpu_custom_call.1} parent=19 // pred_check
          %p398 = pneg %p182
        $region42: #{tpu_custom_call.1} parent=19 // pred_check_branch
          %400 = sbr.rel (%p398) target = $region44
        $region43: #{tpu_custom_call.1} parent=19 // pred_region
          %p401 = scmp.lt.s32.totalorder %s28, 3
          %s402 = scalar_select %p401, %s28, 3
          %s403 = smul.addr %s402, 4
          %s404 = smul.addr %s403, 8
          %s405 = scalar_lea.vmem %s5, %s404
        $region44: #{tpu_custom_call.1} parent=19 // pred_fallthru
          _
        // Predicated region
        $region45: #{tpu_custom_call.1} parent=19 // pred_check
          %p406 = pneg %p208
        $region46: #{tpu_custom_call.1} parent=19 // pred_check_branch
          %408 = sbr.rel (%p406) target = $region48
        $region47: #{tpu_custom_call.1} parent=19 // pred_region
          %p409 = scmp.lt.s32.totalorder %s28, 3
          %s410 = scalar_select %p409, %s28, 3
          %s411 = scalar_lea.vmem %s6, %s410
        $region48: #{tpu_custom_call.1} parent=19 // pred_fallthru
          _
        // Predicated region
        $region49: #{tpu_custom_call.1} parent=19 // pred_check
          %p412 = pneg %p234
        $region50: #{tpu_custom_call.1} parent=19 // pred_check_branch
          %414 = sbr.rel (%p412) target = $region52
        $region51: #{tpu_custom_call.1} parent=19 // pred_region
          %p415 = scmp.lt.s32.totalorder %s28, 3
          %s416 = scalar_select %p415, %s28, 3
          %s417 = scalar_lea.vmem %s7, %s416
        $region52: #{tpu_custom_call.1} parent=19 // pred_fallthru
          _
        // Predicated region
        $region53: #{tpu_custom_call.1} parent=19 // pred_check
          %p418 = pneg %p260
        $region54: #{tpu_custom_call.1} parent=19 // pred_check_branch
          %420 = sbr.rel (%p418) target = $region56
        $region55: #{tpu_custom_call.1} parent=19 // pred_region
          %p421 = scmp.lt.s32.totalorder %s28, 3
          %s422 = scalar_select %p421, %s28, 3
          %s423 = scalar_lea.vmem %s8, %s422
        $region56: #{tpu_custom_call.1} parent=19 // pred_fallthru
          _
        // Predicated region
        $region57: #{tpu_custom_call.1} parent=19 // pred_check
          %p424 = pneg %p286
        $region58: #{tpu_custom_call.1} parent=19 // pred_check_branch
          %426 = sbr.rel (%p424) target = $region60
        $region59: #{tpu_custom_call.1} parent=19 // pred_region
          %p427 = scmp.lt.s32.totalorder %s28, 3
          %s428 = scalar_select %p427, %s28, 3
          %s429 = smul.addr %s428, 8
          %s430 = scalar_lea.vmem %s9, %s429
        $region60: #{tpu_custom_call.1} parent=19 // pred_fallthru
          _
      $region20: #{tpu_custom_call.1} parent=5 // pred_fallthru
        _
      %p431 = scmp.le.s32.totalorder 1, %s20
      %p432 = scmp.lt.s32.totalorder %s20, 9
      %p433 = pnand %p431, %p432
      %p434 = pneg %p433
      // Predicated region
      $region61: #{tpu_custom_call.1} parent=5 // pred_check
        _
      $region62: #{tpu_custom_call.1} parent=5 // pred_check_branch
        %436 = sbr.rel (%p433) target = $region64
      $region63: #{tpu_custom_call.1} parent=5 // pred_region
        %s437 = ssub.s32 %s20, 1
        %p438 = scmp.lt.s32.totalorder %s29, 1
        %s439 = scalar_select %p438, %s29, 1
        %s440 = smul.addr %s439, 8
        %s441 = scalar_lea.vmem %s0, %s440
        %p442 = pneg %p58
        %p443 = pneg %p55
        %p444 = scmp.lt.s32.totalorder %s29, 1
        %s445 = scalar_select %p444, %s29, 1
        %s446 = smul.addr %s445, 8
        %s447 = scalar_lea.vmem %s1, %s446
        %p448 = pneg %p84
        %p449 = pneg %p81
        %p450 = scmp.lt.s32.totalorder %s29, 1
        %s451 = scalar_select %p450, %s29, 1
        %s452 = smul.addr %s451, 8
        %s453 = scalar_lea.vmem %s2, %s452
        %p454 = pneg %p110
        %p455 = pneg %p107
        %p456 = scmp.lt.s32.totalorder %s30, 3
        %s457 = scalar_select %p456, %s30, 3
        %s458 = smul.addr %s457, 4
        %s459 = smul.addr %s458, 8
        %s460 = scalar_lea.vmem %s3, %s459
        %p461 = pneg %p136
        %p462 = pneg %p133
        %p463 = scmp.lt.s32.totalorder %s30, 3
        %s464 = scalar_select %p463, %s30, 3
        %s465 = smul.addr %s464, 4
        %s466 = smul.addr %s465, 8
        %s467 = scalar_lea.vmem %s4, %s466
        %p468 = pneg %p162
        %p469 = pneg %p159
        %p470 = scmp.lt.s32.totalorder %s30, 3
        %s471 = scalar_select %p470, %s30, 3
        %s472 = smul.addr %s471, 4
        %s473 = smul.addr %s472, 8
        %s474 = scalar_lea.vmem %s5, %s473
        %p475 = pneg %p188
        %p476 = pneg %p185
        %p477 = scmp.lt.s32.totalorder %s30, 3
        %s478 = scalar_select %p477, %s30, 3
        %s479 = scalar_lea.vmem %s6, %s478
        %p480 = pneg %p214
        %p481 = pneg %p211
        %p482 = scmp.lt.s32.totalorder %s30, 3
        %s483 = scalar_select %p482, %s30, 3
        %s484 = scalar_lea.vmem %s7, %s483
        %p485 = pneg %p240
        %p486 = pneg %p237
        %p487 = scmp.lt.s32.totalorder %s30, 3
        %s488 = scalar_select %p487, %s30, 3
        %s489 = scalar_lea.vmem %s8, %s488
        %p490 = pneg %p266
        %p491 = pneg %p263
        %p492 = scmp.lt.s32.totalorder %s30, 3
        %s493 = scalar_select %p492, %s30, 3
        %s494 = smul.addr %s493, 8
        %s495 = scalar_lea.vmem %s9, %s494
        %p496 = pneg %p292
        %p497 = pneg %p289
        %p498 = pneg %p313
        %p499 = pneg %p310
        %p500 = pneg %p339
        %p501 = pneg %p336
        %s502 = sand.u32 %s326, 1
        %s503 = scalar_lea.sflag [#allocation4], %s502
        %s504 = sand.u32 %s326, 1
        %s505 = smul.addr %s504, 8
        %s506 = scalar_lea.vmem [#allocation3], %s505
        %p507 = scmp.lt.s32.totalorder %s29, 1
        %s508 = scalar_select %p507, %s29, 1
        %s509 = smul.addr %s508, 8
        %s510 = scalar_lea.vmem %s0, %s509
        %p511 = scmp.lt.s32.totalorder %s29, 1
        %s512 = scalar_select %p511, %s29, 1
        %s513 = smul.addr %s512, 8
        %s514 = scalar_lea.vmem %s1, %s513
        %p515 = scmp.lt.s32.totalorder %s29, 1
        %s516 = scalar_select %p515, %s29, 1
        %s517 = smul.addr %s516, 8
        %s518 = scalar_lea.vmem %s2, %s517
        %p519 = scmp.lt.s32.totalorder %s30, 3
        %s520 = scalar_select %p519, %s30, 3
        %s521 = smul.addr %s520, 4
        %s522 = smul.addr %s521, 8
        %s523 = scalar_lea.vmem %s3, %s522
        %p524 = scmp.lt.s32.totalorder %s30, 3
        %s525 = scalar_select %p524, %s30, 3
        %s526 = smul.addr %s525, 4
        %s527 = smul.addr %s526, 8
        %s528 = scalar_lea.vmem %s4, %s527
        %p529 = scmp.lt.s32.totalorder %s30, 3
        %s530 = scalar_select %p529, %s30, 3
        %s531 = smul.addr %s530, 4
        %s532 = smul.addr %s531, 8
        %s533 = scalar_lea.vmem %s5, %s532
        %p534 = scmp.lt.s32.totalorder %s30, 3
        %s535 = scalar_select %p534, %s30, 3
        %s536 = scalar_lea.vmem %s6, %s535
        %p537 = scmp.lt.s32.totalorder %s30, 3
        %s538 = scalar_select %p537, %s30, 3
        %s539 = scalar_lea.vmem %s7, %s538
        %p540 = scmp.lt.s32.totalorder %s30, 3
        %s541 = scalar_select %p540, %s30, 3
        %s542 = scalar_lea.vmem %s8, %s541
        %p543 = scmp.lt.s32.totalorder %s30, 3
        %s544 = scalar_select %p543, %s30, 3
        %s545 = smul.addr %s544, 8
        %s546 = scalar_lea.vmem %s9, %s545
        %v547 = vld [vmem:[%s510] sm:$0xff]
        %v548 = vld [vmem:[%s514] sm:$0xff]
        %v549 = vld [vmem:[%s518] sm:$0xff]
        %v550 = vld [vmem:[%s523] sm:$0xff]
        %v551 = vld [vmem:[%s523 + $0x8] sm:$0xff]
        %v552 = vld [vmem:[%s523 + $0x10] sm:$0xff]
        %v553 = vld [vmem:[%s523 + $0x18] sm:$0xff]
        %v554 = vld [vmem:[%s536] sm:$0x1]
        %v556 = vlaneseq
        %v557 = vshrl.u32 %v556, 7
        %v558 = vsub.s32 0, %v557
        %v559 = vrot.slane %v554, %v558
        %vm561 = vcmask 261120
        %v563 = vsel %vm561, %v547, 0
        %565 = vmatprep.subr.mxu0 0.0
        %566 = vmatpush1.msra.mxu0 %v550
        %567 = vmatprep.subr.mxu0 0.0
        %568 = vmatpush1.msra.mxu0 %v551
        %569 = vmatprep.subr.mxu0 0.0
        %570 = vmatpush1.msra.mxu0 %v552
        %571 = vmatprep.subr.mxu0 0.0
        %572 = vmatpush1.msra.mxu0 %v553
        %573 = vmatprep.subr.mxu0 0.0
        %574 = vmatpush1.msra.mxu0 0.0
        %575 = vmatprep.subr.mxu0 0.0
        %576 = vmatpush1.msra.mxu0 0.0
        %577 = vmatprep.subr.mxu0 0.0
        %578 = vmatpush1.msra.mxu0 0.0
        %579 = vmatprep.subr.mxu0 0.0
        %580 = vmatpush1.msra.mxu0 0.0
        %581 = vmatprep.subr.mxu0 0.0
        %582 = vmatpush1.msra.mxu0 0.0
        %583 = vmatprep.subr.mxu0 0.0
        %584 = vmatpush1.msra.mxu0 0.0
        %585 = vmatprep.subr.mxu0 0.0
        %586 = vmatpush1.msra.mxu0 0.0
        %587 = vmatprep.subr.mxu0 0.0
        %588 = vmatpush1.msra.mxu0 0.0
        %589 = vmatprep.subr.mxu0 0.0
        %590 = vmatpush1.msra.mxu0 0.0
        %591 = vmatprep.subr.mxu0 0.0
        %592 = vmatpush1.msra.mxu0 0.0
        %593 = vmatprep.subr.mxu0 0.0
        %594 = vmatpush1.msra.mxu0 0.0
        %595 = vmatprep.subr.mxu0 0.0
        %596 = vmatpush1.msra.mxu0 0.0
        %597 = vmatprep.subr.mxu0 0.0
        %598 = vmatpush1.msra.mxu0 0.0
        %599 = vmatprep.subr.mxu0 0.0
        %600 = vmatpush1.msra.mxu0 0.0
        %601 = vmatprep.subr.mxu0 0.0
        %602 = vmatpush1.msra.mxu0 0.0
        %603 = vmatprep.subr.mxu0 0.0
        %604 = vmatpush1.msra.mxu0 0.0
        %605 = vmatprep.subr.mxu0 0.0
        %606 = vmatpush1.msra.mxu0 0.0
        %607 = vmatprep.subr.mxu0 0.0
        %608 = vmatpush1.msra.mxu0 0.0
        %609 = vmatprep.subr.mxu0 0.0
        %610 = vmatpush1.msra.mxu0 0.0
        %611 = vmatprep.subr.mxu0 0.0
        %612 = vmatpush1.msra.mxu0 0.0
        %613 = vmatprep.subr.mxu0 0.0
        %614 = vmatpush1.msra.mxu0 0.0
        %615 = vmatprep.subr.mxu0 0.0
        %616 = vmatpush1.msra.mxu0 0.0
        %617 = vmatprep.subr.mxu0 0.0
        %618 = vmatpush1.msra.mxu0 0.0
        %619 = vmatprep.subr.mxu0 0.0
        %620 = vmatpush1.msra.mxu0 0.0
        %621 = vmatprep.subr.mxu0 0.0
        %622 = vmatpush1.msra.mxu0 0.0
        %623 = vmatprep.subr.mxu0 0.0
        %624 = vmatpush1.msra.mxu0 0.0
        %625 = vmatprep.subr.mxu0 0.0
        %626 = vmatpush1.msra.mxu0 0.0
        %627 = vmatprep.subr.mxu0 0.0
        %628 = vmatpush1.msra.mxu0 0.0
        %629 = vmatprep.mubr.f32.mxu0 0.0
        %630 = vmatmul.mubr.f32.gmra.mrb[0].mxu0 %v563
        %v631 = vpop.f32.mrb[0].mxu0
        %v632 = vadd.f32 %v559, %v631
        %v633 = vpop.f32.mrb[0].mxu0
        %634 = vdwg.mxu0
        %v635 = vld [vmem:[%s528] sm:$0xff]
        %v636 = vld [vmem:[%s528 + $0x8] sm:$0xff]
        %v637 = vld [vmem:[%s528 + $0x10] sm:$0xff]
        %v638 = vld [vmem:[%s528 + $0x18] sm:$0xff]
        %v639 = vld [vmem:[%s539] sm:$0x1]
        %v641 = vlaneseq
        %v642 = vshrl.u32 %v641, 7
        %v643 = vsub.s32 0, %v642
        %v644 = vrot.slane %v639, %v643
        %v647 = vsel %vm561, %v548, 0
        %649 = vmatprep.subr.mxu0 0.0
        %650 = vmatpush1.msra.mxu0 %v635
        %651 = vmatprep.subr.mxu0 0.0
        %652 = vmatpush1.msra.mxu0 %v636
        %653 = vmatprep.subr.mxu0 0.0
        %654 = vmatpush1.msra.mxu0 %v637
        %655 = vmatprep.subr.mxu0 0.0
        %656 = vmatpush1.msra.mxu0 %v638
        %657 = vmatprep.subr.mxu0 0.0
        %658 = vmatpush1.msra.mxu0 0.0
        %659 = vmatprep.subr.mxu0 0.0
        %660 = vmatpush1.msra.mxu0 0.0
        %661 = vmatprep.subr.mxu0 0.0
        %662 = vmatpush1.msra.mxu0 0.0
        %663 = vmatprep.subr.mxu0 0.0
        %664 = vmatpush1.msra.mxu0 0.0
        %665 = vmatprep.subr.mxu0 0.0
        %666 = vmatpush1.msra.mxu0 0.0
        %667 = vmatprep.subr.mxu0 0.0
        %668 = vmatpush1.msra.mxu0 0.0
        %669 = vmatprep.subr.mxu0 0.0
        %670 = vmatpush1.msra.mxu0 0.0
        %671 = vmatprep.subr.mxu0 0.0
        %672 = vmatpush1.msra.mxu0 0.0
        %673 = vmatprep.subr.mxu0 0.0
        %674 = vmatpush1.msra.mxu0 0.0
        %675 = vmatprep.subr.mxu0 0.0
        %676 = vmatpush1.msra.mxu0 0.0
        %677 = vmatprep.subr.mxu0 0.0
        %678 = vmatpush1.msra.mxu0 0.0
        %679 = vmatprep.subr.mxu0 0.0
        %680 = vmatpush1.msra.mxu0 0.0
        %681 = vmatprep.subr.mxu0 0.0
        %682 = vmatpush1.msra.mxu0 0.0
        %683 = vmatprep.subr.mxu0 0.0
        %684 = vmatpush1.msra.mxu0 0.0
        %685 = vmatprep.subr.mxu0 0.0
        %686 = vmatpush1.msra.mxu0 0.0
        %687 = vmatprep.subr.mxu0 0.0
        %688 = vmatpush1.msra.mxu0 0.0
        %689 = vmatprep.subr.mxu0 0.0
        %690 = vmatpush1.msra.mxu0 0.0
        %691 = vmatprep.subr.mxu0 0.0
        %692 = vmatpush1.msra.mxu0 0.0
        %693 = vmatprep.subr.mxu0 0.0
        %694 = vmatpush1.msra.mxu0 0.0
        %695 = vmatprep.subr.mxu0 0.0
        %696 = vmatpush1.msra.mxu0 0.0
        %697 = vmatprep.subr.mxu0 0.0
        %698 = vmatpush1.msra.mxu0 0.0
        %699 = vmatprep.subr.mxu0 0.0
        %700 = vmatpush1.msra.mxu0 0.0
        %701 = vmatprep.subr.mxu0 0.0
        %702 = vmatpush1.msra.mxu0 0.0
        %703 = vmatprep.subr.mxu0 0.0
        %704 = vmatpush1.msra.mxu0 0.0
        %705 = vmatprep.subr.mxu0 0.0
        %706 = vmatpush1.msra.mxu0 0.0
        %707 = vmatprep.subr.mxu0 0.0
        %708 = vmatpush1.msra.mxu0 0.0
        %709 = vmatprep.subr.mxu0 0.0
        %710 = vmatpush1.msra.mxu0 0.0
        %711 = vmatprep.subr.mxu0 0.0
        %712 = vmatpush1.msra.mxu0 0.0
        %713 = vmatprep.mubr.f32.mxu0 0.0
        %714 = vmatmul.mubr.f32.gmra.mrb[0].mxu0 %v647
        %v715 = vpop.f32.mrb[0].mxu0
        %v716 = vadd.f32 %v644, %v715
        %v717 = vpop.f32.mrb[0].mxu0
        %718 = vdwg.mxu0
        %v719 = vld [vmem:[%s533] sm:$0xff]
        %v720 = vld [vmem:[%s533 + $0x8] sm:$0xff]
        %v721 = vld [vmem:[%s533 + $0x10] sm:$0xff]
        %v722 = vld [vmem:[%s533 + $0x18] sm:$0xff]
        %v723 = vld [vmem:[%s542] sm:$0x1]
        %v725 = vlaneseq
        %v726 = vshrl.u32 %v725, 7
        %v727 = vsub.s32 0, %v726
        %v728 = vrot.slane %v723, %v727
        %v731 = vsel %vm561, %v549, 0
        %733 = vmatprep.subr.mxu0 0.0
        %734 = vmatpush1.msra.mxu0 %v719
        %735 = vmatprep.subr.mxu0 0.0
        %736 = vmatpush1.msra.mxu0 %v720
        %737 = vmatprep.subr.mxu0 0.0
        %738 = vmatpush1.msra.mxu0 %v721
        %739 = vmatprep.subr.mxu0 0.0
        %740 = vmatpush1.msra.mxu0 %v722
        %741 = vmatprep.subr.mxu0 0.0
        %742 = vmatpush1.msra.mxu0 0.0
        %743 = vmatprep.subr.mxu0 0.0
        %744 = vmatpush1.msra.mxu0 0.0
        %745 = vmatprep.subr.mxu0 0.0
        %746 = vmatpush1.msra.mxu0 0.0
        %747 = vmatprep.subr.mxu0 0.0
        %748 = vmatpush1.msra.mxu0 0.0
        %749 = vmatprep.subr.mxu0 0.0
        %750 = vmatpush1.msra.mxu0 0.0
        %751 = vmatprep.subr.mxu0 0.0
        %752 = vmatpush1.msra.mxu0 0.0
        %753 = vmatprep.subr.mxu0 0.0
        %754 = vmatpush1.msra.mxu0 0.0
        %755 = vmatprep.subr.mxu0 0.0
        %756 = vmatpush1.msra.mxu0 0.0
        %757 = vmatprep.subr.mxu0 0.0
        %758 = vmatpush1.msra.mxu0 0.0
        %759 = vmatprep.subr.mxu0 0.0
        %760 = vmatpush1.msra.mxu0 0.0
        %761 = vmatprep.subr.mxu0 0.0
        %762 = vmatpush1.msra.mxu0 0.0
        %763 = vmatprep.subr.mxu0 0.0
        %764 = vmatpush1.msra.mxu0 0.0
        %765 = vmatprep.subr.mxu0 0.0
        %766 = vmatpush1.msra.mxu0 0.0
        %767 = vmatprep.subr.mxu0 0.0
        %768 = vmatpush1.msra.mxu0 0.0
        %769 = vmatprep.subr.mxu0 0.0
        %770 = vmatpush1.msra.mxu0 0.0
        %771 = vmatprep.subr.mxu0 0.0
        %772 = vmatpush1.msra.mxu0 0.0
        %773 = vmatprep.subr.mxu0 0.0
        %774 = vmatpush1.msra.mxu0 0.0
        %775 = vmatprep.subr.mxu0 0.0
        %776 = vmatpush1.msra.mxu0 0.0
        %777 = vmatprep.subr.mxu0 0.0
        %778 = vmatpush1.msra.mxu0 0.0
        %779 = vmatprep.subr.mxu0 0.0
        %780 = vmatpush1.msra.mxu0 0.0
        %781 = vmatprep.subr.mxu0 0.0
        %782 = vmatpush1.msra.mxu0 0.0
        %783 = vmatprep.subr.mxu0 0.0
        %784 = vmatpush1.msra.mxu0 0.0
        %785 = vmatprep.subr.mxu0 0.0
        %786 = vmatpush1.msra.mxu0 0.0
        %787 = vmatprep.subr.mxu0 0.0
        %788 = vmatpush1.msra.mxu0 0.0
        %789 = vmatprep.subr.mxu0 0.0
        %790 = vmatpush1.msra.mxu0 0.0
        %791 = vmatprep.subr.mxu0 0.0
        %792 = vmatpush1.msra.mxu0 0.0
        %793 = vmatprep.subr.mxu0 0.0
        %794 = vmatpush1.msra.mxu0 0.0
        %795 = vmatprep.subr.mxu0 0.0
        %796 = vmatpush1.msra.mxu0 0.0
        %797 = vmatprep.mubr.f32.mxu0 0.0
        %798 = vmatmul.mubr.f32.gmra.mrb[0].mxu0 %v731
        %v799 = vpop.f32.mrb[0].mxu0
        %v800 = vadd.f32 %v728, %v799
        %v801 = vpop.f32.mrb[0].mxu0
        %802 = vdwg.mxu0
        %vm803 = vcmask 64512
        %v805 = vsel %vm803, %v632, 0
        %v808 = vsel %vm803, %v716, 0
        %810 = vmatprep.subr.mxu0 0.0
        %811 = vmatpush1.xpose.msra.mxu0 %v808
        %812 = vmatprep.subr.mxu0 0.0
        %813 = vmatpush1.xpose.msra.mxu0 0.0
        %814 = vmatprep.subr.mxu0 0.0
        %815 = vmatpush1.xpose.msra.mxu0 0.0
        %816 = vmatprep.subr.mxu0 0.0
        %817 = vmatpush1.xpose.msra.mxu0 0.0
        %818 = vmatprep.subr.mxu0 0.0
        %819 = vmatpush1.xpose.msra.mxu0 0.0
        %820 = vmatprep.subr.mxu0 0.0
        %821 = vmatpush1.xpose.msra.mxu0 0.0
        %822 = vmatprep.subr.mxu0 0.0
        %823 = vmatpush1.xpose.msra.mxu0 0.0
        %824 = vmatprep.subr.mxu0 0.0
        %825 = vmatpush1.xpose.msra.mxu0 0.0
        %826 = vmatprep.subr.mxu0 0.0
        %827 = vmatpush1.xpose.msra.mxu0 0.0
        %828 = vmatprep.subr.mxu0 0.0
        %829 = vmatpush1.xpose.msra.mxu0 0.0
        %830 = vmatprep.subr.mxu0 0.0
        %831 = vmatpush1.xpose.msra.mxu0 0.0
        %832 = vmatprep.subr.mxu0 0.0
        %833 = vmatpush1.xpose.msra.mxu0 0.0
        %834 = vmatprep.subr.mxu0 0.0
        %835 = vmatpush1.xpose.msra.mxu0 0.0
        %836 = vmatprep.subr.mxu0 0.0
        %837 = vmatpush1.xpose.msra.mxu0 0.0
        %838 = vmatprep.subr.mxu0 0.0
        %839 = vmatpush1.xpose.msra.mxu0 0.0
        %840 = vmatprep.subr.mxu0 0.0
        %841 = vmatpush1.xpose.msra.mxu0 0.0
        %842 = vmatprep.subr.mxu0 0.0
        %843 = vmatpush1.xpose.msra.mxu0 0.0
        %844 = vmatprep.subr.mxu0 0.0
        %845 = vmatpush1.xpose.msra.mxu0 0.0
        %846 = vmatprep.subr.mxu0 0.0
        %847 = vmatpush1.xpose.msra.mxu0 0.0
        %848 = vmatprep.subr.mxu0 0.0
        %849 = vmatpush1.xpose.msra.mxu0 0.0
        %850 = vmatprep.subr.mxu0 0.0
        %851 = vmatpush1.xpose.msra.mxu0 0.0
        %852 = vmatprep.subr.mxu0 0.0
        %853 = vmatpush1.xpose.msra.mxu0 0.0
        %854 = vmatprep.subr.mxu0 0.0
        %855 = vmatpush1.xpose.msra.mxu0 0.0
        %856 = vmatprep.subr.mxu0 0.0
        %857 = vmatpush1.xpose.msra.mxu0 0.0
        %858 = vmatprep.subr.mxu0 0.0
        %859 = vmatpush1.xpose.msra.mxu0 0.0
        %860 = vmatprep.subr.mxu0 0.0
        %861 = vmatpush1.xpose.msra.mxu0 0.0
        %862 = vmatprep.subr.mxu0 0.0
        %863 = vmatpush1.xpose.msra.mxu0 0.0
        %864 = vmatprep.subr.mxu0 0.0
        %865 = vmatpush1.xpose.msra.mxu0 0.0
        %866 = vmatprep.subr.mxu0 0.0
        %867 = vmatpush1.xpose.msra.mxu0 0.0
        %868 = vmatprep.subr.mxu0 0.0
        %869 = vmatpush1.xpose.msra.mxu0 0.0
        %870 = vmatprep.subr.mxu0 0.0
        %871 = vmatpush1.xpose.msra.mxu0 0.0
        %872 = vmatprep.subr.mxu0 0.0
        %873 = vmatpush1.xpose.msra.mxu0 0.0
        %874 = vmatprep.mubr.f32.mxu0 0.0
        %875 = vmatmul.mubr.f32.gmra.mrb[0].mxu0 %v805
        %v876 = vpop.f32.mrb[0].mxu0
        %v877 = vadd.f32 0.0, %v876
        %v878 = vpop.f32.mrb[0].mxu0
        %879 = vdwg.mxu0
        %v880 = vmul.f32 %v877, 0.35355338
        %v881 = vsel %vm803, %v880, -inf
        %882 = vmax.xlane.f32.xlu0 %v881
        %v883 = vpop.xlane.xlu0 %882
        %v884 = vsub.f32 %v880, %v883
        %v885 = vmul.f32 %v884, 1.442695
        %v886 = vpow.pop %v885
        %v887 = vsel %vm803, %v886, 0.0
        %888 = vadd.xlane.f32.xlu0 %v887
        %v889 = vpop.xlane.xlu0 %888
        %v891 = vsel %vm803, %v886, 0
        %893 = vmatprep.subr.mxu0 0.0
        %894 = vmatpush1.msra.mxu0 %v800
        %895 = vmatprep.subr.mxu0 0.0
        %896 = vmatpush1.msra.mxu0 0.0
        %897 = vmatprep.subr.mxu0 0.0
        %898 = vmatpush1.msra.mxu0 0.0
        %899 = vmatprep.subr.mxu0 0.0
        %900 = vmatpush1.msra.mxu0 0.0
        %901 = vmatprep.subr.mxu0 0.0
        %902 = vmatpush1.msra.mxu0 0.0
        %903 = vmatprep.subr.mxu0 0.0
        %904 = vmatpush1.msra.mxu0 0.0
        %905 = vmatprep.subr.mxu0 0.0
        %906 = vmatpush1.msra.mxu0 0.0
        %907 = vmatprep.subr.mxu0 0.0
        %908 = vmatpush1.msra.mxu0 0.0
        %909 = vmatprep.subr.mxu0 0.0
        %910 = vmatpush1.msra.mxu0 0.0
        %911 = vmatprep.subr.mxu0 0.0
        %912 = vmatpush1.msra.mxu0 0.0
        %913 = vmatprep.subr.mxu0 0.0
        %914 = vmatpush1.msra.mxu0 0.0
        %915 = vmatprep.subr.mxu0 0.0
        %916 = vmatpush1.msra.mxu0 0.0
        %917 = vmatprep.subr.mxu0 0.0
        %918 = vmatpush1.msra.mxu0 0.0
        %919 = vmatprep.subr.mxu0 0.0
        %920 = vmatpush1.msra.mxu0 0.0
        %921 = vmatprep.subr.mxu0 0.0
        %922 = vmatpush1.msra.mxu0 0.0
        %923 = vmatprep.subr.mxu0 0.0
        %924 = vmatpush1.msra.mxu0 0.0
        %925 = vmatprep.subr.mxu0 0.0
        %926 = vmatpush1.msra.mxu0 0.0
        %927 = vmatprep.subr.mxu0 0.0
        %928 = vmatpush1.msra.mxu0 0.0
        %929 = vmatprep.subr.mxu0 0.0
        %930 = vmatpush1.msra.mxu0 0.0
        %931 = vmatprep.subr.mxu0 0.0
        %932 = vmatpush1.msra.mxu0 0.0
        %933 = vmatprep.subr.mxu0 0.0
        %934 = vmatpush1.msra.mxu0 0.0
        %935 = vmatprep.subr.mxu0 0.0
        %936 = vmatpush1.msra.mxu0 0.0
        %937 = vmatprep.subr.mxu0 0.0
        %938 = vmatpush1.msra.mxu0 0.0
        %939 = vmatprep.subr.mxu0 0.0
        %940 = vmatpush1.msra.mxu0 0.0
        %941 = vmatprep.subr.mxu0 0.0
        %942 = vmatpush1.msra.mxu0 0.0
        %943 = vmatprep.subr.mxu0 0.0
        %944 = vmatpush1.msra.mxu0 0.0
        %945 = vmatprep.subr.mxu0 0.0
        %946 = vmatpush1.msra.mxu0 0.0
        %947 = vmatprep.subr.mxu0 0.0
        %948 = vmatpush1.msra.mxu0 0.0
        %949 = vmatprep.subr.mxu0 0.0
        %950 = vmatpush1.msra.mxu0 0.0
        %951 = vmatprep.subr.mxu0 0.0
        %952 = vmatpush1.msra.mxu0 0.0
        %953 = vmatprep.subr.mxu0 0.0
        %954 = vmatpush1.msra.mxu0 0.0
        %955 = vmatprep.subr.mxu0 0.0
        %956 = vmatpush1.msra.mxu0 0.0
        %957 = vmatprep.mubr.f32.mxu0 0.0
        %958 = vmatmul.mubr.f32.gmra.mrb[0].mxu0 %v891
        %v959 = vpop.f32.mrb[0].mxu0
        %v960 = vadd.f32 0.0, %v959
        %v961 = vpop.f32.mrb[0].mxu0
        %962 = vdwg.mxu0
        %v963 = vrcp.pop %v889
        %v964 = vmul.f32 %v960, %v963
        %v965 = vld [vmem:[%s546] sm:$0xff]
        %v967 = vsel %vm803, %v964, 0
        %969 = vmatprep.subr.mxu0 0.0
        %970 = vmatpush1.msra.mxu0 %v965
        %971 = vmatprep.subr.mxu0 0.0
        %972 = vmatpush1.msra.mxu0 0.0
        %973 = vmatprep.subr.mxu0 0.0
        %974 = vmatpush1.msra.mxu0 0.0
        %975 = vmatprep.subr.mxu0 0.0
        %976 = vmatpush1.msra.mxu0 0.0
        %977 = vmatprep.subr.mxu0 0.0
        %978 = vmatpush1.msra.mxu0 0.0
        %979 = vmatprep.subr.mxu0 0.0
        %980 = vmatpush1.msra.mxu0 0.0
        %981 = vmatprep.subr.mxu0 0.0
        %982 = vmatpush1.msra.mxu0 0.0
        %983 = vmatprep.subr.mxu0 0.0
        %984 = vmatpush1.msra.mxu0 0.0
        %985 = vmatprep.subr.mxu0 0.0
        %986 = vmatpush1.msra.mxu0 0.0
        %987 = vmatprep.subr.mxu0 0.0
        %988 = vmatpush1.msra.mxu0 0.0
        %989 = vmatprep.subr.mxu0 0.0
        %990 = vmatpush1.msra.mxu0 0.0
        %991 = vmatprep.subr.mxu0 0.0
        %992 = vmatpush1.msra.mxu0 0.0
        %993 = vmatprep.subr.mxu0 0.0
        %994 = vmatpush1.msra.mxu0 0.0
        %995 = vmatprep.subr.mxu0 0.0
        %996 = vmatpush1.msra.mxu0 0.0
        %997 = vmatprep.subr.mxu0 0.0
        %998 = vmatpush1.msra.mxu0 0.0
        %999 = vmatprep.subr.mxu0 0.0
        %1000 = vmatpush1.msra.mxu0 0.0
        %1001 = vmatprep.subr.mxu0 0.0
        %1002 = vmatpush1.msra.mxu0 0.0
        %1003 = vmatprep.subr.mxu0 0.0
        %1004 = vmatpush1.msra.mxu0 0.0
        %1005 = vmatprep.subr.mxu0 0.0
        %1006 = vmatpush1.msra.mxu0 0.0
        %1007 = vmatprep.subr.mxu0 0.0
        %1008 = vmatpush1.msra.mxu0 0.0
        %1009 = vmatprep.subr.mxu0 0.0
        %1010 = vmatpush1.msra.mxu0 0.0
        %1011 = vmatprep.subr.mxu0 0.0
        %1012 = vmatpush1.msra.mxu0 0.0
        %1013 = vmatprep.subr.mxu0 0.0
        %1014 = vmatpush1.msra.mxu0 0.0
        %1015 = vmatprep.subr.mxu0 0.0
        %1016 = vmatpush1.msra.mxu0 0.0
        %1017 = vmatprep.subr.mxu0 0.0
        %1018 = vmatpush1.msra.mxu0 0.0
        %1019 = vmatprep.subr.mxu0 0.0
        %1020 = vmatpush1.msra.mxu0 0.0
        %1021 = vmatprep.subr.mxu0 0.0
        %1022 = vmatpush1.msra.mxu0 0.0
        %1023 = vmatprep.subr.mxu0 0.0
        %1024 = vmatpush1.msra.mxu0 0.0
        %1025 = vmatprep.subr.mxu0 0.0
        %1026 = vmatpush1.msra.mxu0 0.0
        %1027 = vmatprep.subr.mxu0 0.0
        %1028 = vmatpush1.msra.mxu0 0.0
        %1029 = vmatprep.subr.mxu0 0.0
        %1030 = vmatpush1.msra.mxu0 0.0
        %1031 = vmatprep.subr.mxu0 0.0
        %1032 = vmatpush1.msra.mxu0 0.0
        %1033 = vmatprep.mubr.f32.mxu0 0.0
        %1034 = vmatmul.mubr.f32.gmra.mrb[0].mxu0 %v967
        %v1035 = vpop.f32.mrb[0].mxu0
        %v1036 = vadd.f32 0.0, %v1035
        %v1037 = vpop.f32.mrb[0].mxu0
        %1038 = vdwg.mxu0
        %p1039 = scmp.eq.s32.totalorder %s30, 0
        // Predicated region
        $region65: #{tpu_custom_call.1} parent=63 // pred_check
          %p1040 = pneg %p1039
        $region66: #{tpu_custom_call.1} parent=63 // pred_check_branch
          %1042 = sbr.rel (%p1040) target = $region68
        $region67: #{tpu_custom_call.1} parent=63 // pred_region
          %v1043 = vld [vmem:[%s10] sm:$0x1]
          %v1045 = vlaneseq
          %v1046 = vshrl.u32 %v1045, 7
          %v1047 = vsub.s32 0, %v1046
          %v1048 = vrot.slane %v1043, %v1047
          %1050 = vst.msk [vmem:[#allocation2] sm:$0xff] %vm561, %v1048
        $region68: #{tpu_custom_call.1} parent=63 // pred_fallthru
          _
        %v1051 = vld [vmem:[#allocation2] sm:$0xff]
        %v1052 = vadd.f32 %v1051, %v1036
        %1053 = vst.msk [vmem:[#allocation2] sm:$0xff] %vm561, %v1052
        %p1054 = scmp.eq.s32.totalorder %s30, 3
        // Predicated region
        $region69: #{tpu_custom_call.1} parent=63 // pred_check
          %p1055 = pneg %p1054
        $region70: #{tpu_custom_call.1} parent=63 // pred_check_branch
          %1057 = sbr.rel (%p1055) target = $region72
        $region71: #{tpu_custom_call.1} parent=63 // pred_region
          %v1058 = vld [vmem:[#allocation2] sm:$0xff]
          %1059 = vst.msk [vmem:[%s506] sm:$0xff] %vm561, %v1058
        $region72: #{tpu_custom_call.1} parent=63 // pred_fallthru
          _
        %s1060 = sand.u32 %s326, 1
        %s1061 = scalar_lea.sflag [#allocation4], %s1060
        %s1062 = sand.u32 %s326, 1
        %s1063 = smul.addr %s1062, 8
        %s1064 = scalar_lea.vmem [#allocation3], %s1063
        // Predicated region
        $region73: #{tpu_custom_call.1} parent=63 // pred_check
          %p1065 = pneg %p336
        $region74: #{tpu_custom_call.1} parent=63 // pred_check_branch
          %1067 = sbr.rel (%p1065) target = $region76
        $region75: #{tpu_custom_call.1} parent=63 // pred_region
          %s1069 = ssub.s32 128, 128
          %1070 = vsyncadd %s1061, %s1069
          %s1071 = smul.addr %s29, 128
          %s1072 = scalar_lea.hbm %s11, %s1071
          %s1074 = sshll.u32 %s1064, 4
          %s1075 = int_to_ptr.vmem [resolvable:$true] %s1074
          %1077 = dma.vmem_to_hbm [thread:$0]  %s1075, 128, %s1072, %s1061
        $region76: #{tpu_custom_call.1} parent=63 // pred_fallthru
          _
      $region64: #{tpu_custom_call.1} parent=5 // pred_fallthru
        _
      %p1078 = scmp.le.s32.totalorder 2, %s20
      // Predicated region
      $region77: #{tpu_custom_call.1} parent=5 // pred_check
        %p1079 = pneg %p1078
      $region78: #{tpu_custom_call.1} parent=5 // pred_check_branch
        %1081 = sbr.rel (%p1079) target = $region80
      $region79: #{tpu_custom_call.1} parent=5 // pred_region
        %s1082 = ssub.s32 %s20, 2
        // Predicated region
        $region81: #{tpu_custom_call.1} parent=79 // pred_check
          %p1083 = pneg %p342
        $region82: #{tpu_custom_call.1} parent=79 // pred_check_branch
          %1085 = sbr.rel (%p1083) target = $region84
        $region83: #{tpu_custom_call.1} parent=79 // pred_region
          %s1086 = sand.u32 %s327, 1
          %s1087 = scalar_lea.sflag [#allocation4], %s1086
          %s1088 = sand.u32 %s327, 1
          %s1089 = smul.addr %s1088, 8
          %s1090 = scalar_lea.vmem [#allocation3], %s1089
          %1091 = dma.done %s1087, 128
        $region84: #{tpu_custom_call.1} parent=79 // pred_fallthru
          _
      $region80: #{tpu_custom_call.1} parent=5 // pred_fallthru
        _
    $region6: #{tpu_custom_call.1} parent=1 // loop_footer
      %s24 = sadd.s32 1, %s20
    $region7: #{tpu_custom_call.1} parent=1 // loop_footer_branch
      %19 = sbr.rel target = $region3
    $region8: #{tpu_custom_call.1} parent=1 // loop_exit
      _
    %1092 = vsyncpa [#allocation4], 1
    %s1093 = scalar_lea.sflag [#allocation4], 1
    %1094 = vsyncpa %s1093, 1

</llo_original>
